<compile_context>
chip_gen: v6e
topology: v6e:2x2x1
jax: 0.10.0
libtpu: 0.0.40
codegen_flags: <defaults>
</compile_context>

<pallas_src>
import jax
import jax.numpy as jnp
from jax.experimental import pallas as pl
from jax.experimental.pallas import tpu as pltpu


def lstm_kernel(emb_ref,    # (T, E)  bf16 gathered embedding rows
                wih_ref,    # (E, 4H) bf16 W_ih^T
                bias_ref,   # (1, 4H) f32  b_ih + b_hh
                wfc_ref,    # (H, V)  bf16 W_fc^T
                bfc_ref,    # (1, V)  f32  b_fc
                out_ref):   # (T, V)  f32  logits; row t == module.forward(tokens[t])
    H4 = bias_ref.shape[1]
    H = H4 // 4

    # gates = X @ W_ih^T + (b_ih + b_hh);  W_hh @ h0 == 0 because h0 == 0.
    gates = (jnp.dot(emb_ref[...], wih_ref[...],
                     preferred_element_type=jnp.float32)
             + bias_ref[...])                            # (T, 4H), PyTorch order i,f,g,o

    # Two full-vector EUP passes, then cheap static lane slices per gate.
    sig = jax.nn.sigmoid(gates)
    tnh = jnp.tanh(gates)

    i_g = sig[:, 0 * H:1 * H]
    g_g = tnh[:, 2 * H:3 * H]
    o_g = sig[:, 3 * H:4 * H]

    # c0 == 0  =>  c = f_g * c0 + i_g * g_g = i_g * g_g
    c = i_g * g_g
    h = o_g * jnp.tanh(c)                                # (T, H) f32

    logits = (jnp.dot(h.astype(wfc_ref.dtype), wfc_ref[...],
                      preferred_element_type=jnp.float32)
              + bfc_ref[...])                            # (T, V) f32

    out_ref[...] = logits


def prepare_params(emb_table, w_ih, w_hh, b_ih, b_hh, w_fc, b_fc):
    """One-time layout/dtype prep, hoisted out of the per-call path.

    w_hh is accepted for parity with the PyTorch module but is unused: the
    module's forward() always starts from h0 == 0, so W_hh @ h0 == 0.
    """
    del w_hh
    H4 = w_ih.shape[0]
    V = w_fc.shape[0]
    return {
        "emb": emb_table.astype(jnp.bfloat16),                      # (Vocab, E) bf16
        "wih_t": jnp.asarray(w_ih.T, jnp.bfloat16),                 # (E, 4H)
        "bias": (b_ih + b_hh).reshape(1, H4).astype(jnp.float32),   # (1, 4H)
        "wfc_t": jnp.asarray(w_fc.T, jnp.bfloat16),                 # (H, V)
        "bfc": b_fc.reshape(1, V).astype(jnp.float32),              # (1, V)
    }


@jax.jit
def lstm_forward(tokens, params):
    """tokens: int32 (T,). Returns (T, V) logits; row t == module.forward(tokens[t])."""
    wih_t = params["wih_t"]
    bias = params["bias"]
    wfc_t = params["wfc_t"]
    bfc = params["bfc"]

    # Wrapper-side contiguous gather: one (T, E) bf16 block instead of T row DMAs.
    emb_rows = params["emb"][tokens.astype(jnp.int32)]

    T = tokens.shape[0]
    E, H4 = wih_t.shape
    H, V = wfc_t.shape

    vmem = pl.BlockSpec(memory_space=pltpu.MemorySpace.VMEM)

    cost = pl.CostEstimate(
        flops=2 * T * (E * H4 + H * V),
        transcendentals=T * (2 * H4 + H),
        bytes_accessed=(2 * (T * E + E * H4 + H * V)     # bf16 activations + weights
                        + 4 * (H4 + V)                   # f32 biases
                        + 4 * T * V),                    # f32 logits out
    )

    return pl.pallas_call(
        lstm_kernel,
        out_shape=jax.ShapeDtypeStruct((T, V), jnp.float32),
        in_specs=[vmem, vmem, vmem, vmem, vmem],
        out_specs=vmem,
        cost_estimate=cost,
        # TODO(synk): at realistic sizes (V ~ 32-50k, H >= 1024, large T) add a
        # grid over T ("parallel", for v7x's 2 TCs) and over V with lane-dense
        # (tile_T, tile_V) output blocks instead of fully resident operands.
    )(emb_rows, wih_t, bias, wfc_t, bfc)


def lstm_forward_ref(tokens, emb_table, w_ih, w_hh, b_ih, b_hh, w_fc, b_fc):
    """Pure-JAX reference mirroring the PyTorch forward (and the kernel's bf16 weights)."""
    del w_hh  # h0 == 0, so W_hh @ h0 == 0
    H = w_ih.shape[0] // 4
    wih = w_ih.astype(jnp.bfloat16).astype(jnp.float32)
    wfc = w_fc.astype(jnp.bfloat16).astype(jnp.float32)

    e = emb_table.astype(jnp.bfloat16).astype(jnp.float32)[tokens]   # (T, E)
    gates = e @ wih.T + (b_ih + b_hh)                                # (T, 4H)
    i_g = jax.nn.sigmoid(gates[:, 0 * H:1 * H])
    g_g = jnp.tanh(gates[:, 2 * H:3 * H])
    o_g = jax.nn.sigmoid(gates[:, 3 * H:4 * H])
    c = i_g * g_g                                                    # c0 = 0
    h = o_g * jnp.tanh(c)                                            # h0 = 0
    h = h.astype(jnp.bfloat16).astype(jnp.float32)
    return h @ wfc.T + b_fc


if __name__ == "__main__":
    vocab_size, embedding_dim, hidden_dim = 256, 128, 32
    seq_len = 8   # 8 independent forward() calls fused into one kernel launch

    key = jax.random.PRNGKey(0)
    ks = jax.random.split(key, 8)
    k_lstm = 1.0 / jnp.sqrt(hidden_dim)

    emb_table = jax.random.normal(ks[0], (vocab_size, embedding_dim), jnp.float32)
    w_ih = jax.random.uniform(ks[1], (4 * hidden_dim, embedding_dim), jnp.float32, -k_lstm, k_lstm)
    w_hh = jax.random.uniform(ks[2], (4 * hidden_dim, hidden_dim), jnp.float32, -k_lstm, k_lstm)
    b_ih = jax.random.uniform(ks[3], (4 * hidden_dim,), jnp.float32, -k_lstm, k_lstm)
    b_hh = jax.random.uniform(ks[4], (4 * hidden_dim,), jnp.float32, -k_lstm, k_lstm)
    w_fc = jax.random.uniform(ks[5], (vocab_size, hidden_dim), jnp.float32, -k_lstm, k_lstm)
    b_fc = jax.random.uniform(ks[6], (vocab_size,), jnp.float32, -k_lstm, k_lstm)

    # One-time param prep (transposes / bf16 casts / bias fold).
    params = prepare_params(emb_table, w_ih, w_hh, b_ih, b_hh, w_fc, b_fc)

    # Each token is an independent module.forward(token) call (zero initial state).
    tokens = jnp.array([3, 0, 255, 17, 42, 128, 7, 99], dtype=jnp.int32)
    assert tokens.shape == (seq_len,)

    out = jax.block_until_ready(lstm_forward(tokens, params))
    ref = lstm_forward_ref(tokens, emb_table, w_ih, w_hh, b_ih, b_hh, w_fc, b_fc)

    assert out.shape == (seq_len, vocab_size)
    assert jnp.allclose(out, ref, atol=1e-2, rtol=1e-2), "mismatch vs pure-JAX reference"

    print("KERNEL_OK")
</pallas_src>

<mosaic_0001>
module attributes {stable_mosaic.version = 11 : i64} {
  func.func @lstm_kernel(%arg0: memref<8x128xbf16, #tpu.memory_space<vmem>>, %arg1: memref<128x128xbf16, #tpu.memory_space<vmem>>, %arg2: memref<1x128xf32, #tpu.memory_space<vmem>>, %arg3: memref<32x256xbf16, #tpu.memory_space<vmem>>, %arg4: memref<1x256xf32, #tpu.memory_space<vmem>>, %arg5: memref<8x256xf32, #tpu.memory_space<vmem>>) attributes {dimension_semantics = [], scalar_prefetch = 0 : i64, scratch_operands = 0 : i64, tpu.core_type = #tpu.core_type<tc>} {
    %c0 = arith.constant 0 : index
    %c0_0 = arith.constant 0 : index
    %0 = vector.load %arg0[%c0, %c0_0] : memref<8x128xbf16, #tpu.memory_space<vmem>>, vector<8x128xbf16>
    %c0_1 = arith.constant 0 : index
    %c0_2 = arith.constant 0 : index
    %1 = vector.load %arg1[%c0_1, %c0_2] : memref<128x128xbf16, #tpu.memory_space<vmem>>, vector<128x128xbf16>
    %cst = arith.constant dense<0.000000e+00> : vector<8x128xf32>
    %2 = tpu.matmul %0, %1, %cst {dimension_numbers = #tpu.dot_dimension_numbers<[1], [0], [0], [1], [0, 0, 1, 1], [], []>} : vector<8x128xbf16>, vector<128x128xbf16>, vector<8x128xf32> -> vector<8x128xf32>
    %c0_3 = arith.constant 0 : index
    %c0_4 = arith.constant 0 : index
    %3 = vector.load %arg2[%c0_3, %c0_4] : memref<1x128xf32, #tpu.memory_space<vmem>>, vector<1x128xf32>
    %4 = vector.broadcast %3 : vector<1x128xf32> to vector<8x128xf32>
    %5 = arith.addf %2, %4 : vector<8x128xf32>
    %6 = arith.negf %5 : vector<8x128xf32>
    %7 = math.exp %6 : vector<8x128xf32>
    %cst_5 = arith.constant 1.000000e+00 : f32
    %8 = vector.broadcast %cst_5 : f32 to vector<8x128xf32>
    %9 = arith.addf %8, %7 : vector<8x128xf32>
    %10 = arith.divf %8, %9 : vector<8x128xf32>
    %11 = math.tanh %5 : vector<8x128xf32>
    %12 = vector.extract_strided_slice %10 {offsets = [0, 0], sizes = [8, 32], strides = [1, 1]} : vector<8x128xf32> to vector<8x32xf32>
    %13 = vector.extract_strided_slice %11 {offsets = [0, 64], sizes = [8, 32], strides = [1, 1]} : vector<8x128xf32> to vector<8x32xf32>
    %14 = vector.extract_strided_slice %10 {offsets = [0, 96], sizes = [8, 32], strides = [1, 1]} : vector<8x128xf32> to vector<8x32xf32>
    %15 = arith.mulf %12, %13 : vector<8x32xf32>
    %16 = math.tanh %15 : vector<8x32xf32>
    %17 = arith.mulf %14, %16 : vector<8x32xf32>
    %18 = arith.truncf %17 : vector<8x32xf32> to vector<8x32xbf16>
    %c0_6 = arith.constant 0 : index
    %c0_7 = arith.constant 0 : index
    %19 = vector.load %arg3[%c0_6, %c0_7] : memref<32x256xbf16, #tpu.memory_space<vmem>>, vector<32x256xbf16>
    %cst_8 = arith.constant dense<0.000000e+00> : vector<8x256xf32>
    %20 = tpu.matmul %18, %19, %cst_8 {dimension_numbers = #tpu.dot_dimension_numbers<[1], [0], [0], [1], [0, 0, 1, 1], [], []>} : vector<8x32xbf16>, vector<32x256xbf16>, vector<8x256xf32> -> vector<8x256xf32>
    %c0_9 = arith.constant 0 : index
    %c0_10 = arith.constant 0 : index
    %21 = vector.load %arg4[%c0_9, %c0_10] : memref<1x256xf32, #tpu.memory_space<vmem>>, vector<1x256xf32>
    %22 = vector.broadcast %21 : vector<1x256xf32> to vector<8x256xf32>
    %23 = arith.addf %20, %22 : vector<8x256xf32>
    %c0_11 = arith.constant 0 : index
    %c0_12 = arith.constant 0 : index
    %24 = vector.load %arg5[%c0_11, %c0_12] : memref<8x256xf32, #tpu.memory_space<vmem>>, vector<8x256xf32>
    tpu.vector_store %arg5[%c0_11, %c0_12], %23 {strides = array<i32>} : memref<8x256xf32, #tpu.memory_space<vmem>>, vector<8x256xf32>,
    return
  }
}

</mosaic_0001>

<llo_original>
// kernel: lstm_forward.1
$region0: #{lstm_forward.1}
  #allocation0 [shape = 'u32[]', space=smem, size = 0x4, offset = 0x4, fixed_abs, tag = 'smem constant byte address 0x4 - core index']
  #allocation1 [shape = 'u32[144,128]{1,0:T(1,128)}', space=vmem, size = 0x12000, scoped, tag = 'internal scratch']
  %s0 = inlined_call_operand.vmem [shape: bf16[8,128], index: 0, kind: input, shape index: {}]
  %s1 = inlined_call_operand.hbm [shape: bf16[128,128], index: 1, kind: input, shape index: {}]
  %s2 = inlined_call_operand.vmem [shape: f32[1,128], index: 2, kind: input, shape index: {}]
  %s3 = inlined_call_operand.vmem [shape: bf16[32,256], index: 3, kind: input, shape index: {}]
  %s4 = inlined_call_operand.vmem [shape: f32[1,256], index: 4, kind: input, shape index: {}]
  %s5 = inlined_call_operand.hbm [shape: f32[8,256], index: 5, kind: output, shape index: {}]
  %s6 = sld [smem:[#allocation0]]
  $region34: #{lstm_forward.1} parent=0
    _
  %s8 = ssub.s32 1, %s6
  %s9 = scalar_select 0, %s8, %s6
  $region1: #{lstm_forward.1} parent=0
    #allocation2 [shape = 'u8[32768]{0}', space=vmem, size = 0x8000, scoped, tag = 'input window, operand 1, single buffered']
    #allocation3 [shape = 's32[1]{0}', space=sflag, size = 0x4, scoped, tag = 'scoped memory for lstm_forward.1']
    #allocation4 [shape = 's32[1]{0}', space=sflag, size = 0x4, scoped, tag = 'scoped memory for lstm_forward.1']
    #allocation5 [shape = 'u8[8192]{0}', space=vmem, size = 0x2000, scoped, tag = 'output window, operand 0, single buffered']
    %10 = vsyncpa [#allocation3], 0
    %11 = vsyncpa [#allocation4], 0
    // Predicated region
    $region2: #{lstm_forward.1} parent=1 // pred_check
      _
    $region3: #{lstm_forward.1} parent=1 // pred_check_branch
      %13 = sbr.rel (0) target = $region5
    $region4: #{lstm_forward.1} parent=1 // pred_region
      _
    $region5: #{lstm_forward.1} parent=1 // pred_fallthru
      _
    // Predicated region
    $region6: #{lstm_forward.1} parent=1 // pred_check
      _
    $region7: #{lstm_forward.1} parent=1 // pred_check_branch
      %15 = sbr.rel (0) target = $region9
    $region8: #{lstm_forward.1} parent=1 // pred_region
      %s17 = ssub.s32 1024, 1024
      %18 = vsyncadd [#allocation3], %s17
      %s19 = sshll.u32 [#allocation2], 4
      %s20 = int_to_ptr.vmem [resolvable:$true] %s19
      %25 = dma.hbm_to_vmem [thread:$0]  %s1, 1024, %s20, [#allocation3], 64, 64, 4
    $region9: #{lstm_forward.1} parent=1 // pred_fallthru
      _
    // Predicated region
    $region10: #{lstm_forward.1} parent=1 // pred_check
      _
    $region11: #{lstm_forward.1} parent=1 // pred_check_branch
      %27 = sbr.rel (0) target = $region13
    $region12: #{lstm_forward.1} parent=1 // pred_region
      _
    $region13: #{lstm_forward.1} parent=1 // pred_fallthru
      _
    // Predicated region
    $region14: #{lstm_forward.1} parent=1 // pred_check
      _
    $region15: #{lstm_forward.1} parent=1 // pred_check_branch
      %29 = sbr.rel (0) target = $region17
    $region16: #{lstm_forward.1} parent=1 // pred_region
      _
    $region17: #{lstm_forward.1} parent=1 // pred_fallthru
      _
    // Predicated region
    $region18: #{lstm_forward.1} parent=1 // pred_check
      _
    $region19: #{lstm_forward.1} parent=1 // pred_check_branch
      %31 = sbr.rel (0) target = $region21
    $region20: #{lstm_forward.1} parent=1 // pred_region
      _
    $region21: #{lstm_forward.1} parent=1 // pred_fallthru
      _
    // Predicated region
    $region22: #{lstm_forward.1} parent=1 // pred_check
      _
    $region23: #{lstm_forward.1} parent=1 // pred_check_branch
      %33 = sbr.rel (0) target = $region25
    $region24: #{lstm_forward.1} parent=1 // pred_region
      %34 = dma.done [#allocation3], 1024
    $region25: #{lstm_forward.1} parent=1 // pred_fallthru
      _
    %v36 = vld [vmem:[%s0] sm:$0xf]
    %v37 = vld [vmem:[#allocation2] sm:$0xf]
    %v38 = vld [vmem:[#allocation2 + $0x4] sm:$0xf]
    %v39 = vld [vmem:[#allocation2 + $0x8] sm:$0xf]
    %v40 = vld [vmem:[#allocation2 + $0xc] sm:$0xf]
    %v41 = vld [vmem:[#allocation2 + $0x10] sm:$0xf]
    %v42 = vld [vmem:[#allocation2 + $0x14] sm:$0xf]
    %v43 = vld [vmem:[#allocation2 + $0x18] sm:$0xf]
    %v44 = vld [vmem:[#allocation2 + $0x1c] sm:$0xf]
    %v45 = vld [vmem:[#allocation2 + $0x20] sm:$0xf]
    %v46 = vld [vmem:[#allocation2 + $0x24] sm:$0xf]
    %v47 = vld [vmem:[#allocation2 + $0x28] sm:$0xf]
    %v48 = vld [vmem:[#allocation2 + $0x2c] sm:$0xf]
    %v49 = vld [vmem:[#allocation2 + $0x30] sm:$0xf]
    %v50 = vld [vmem:[#allocation2 + $0x34] sm:$0xf]
    %v51 = vld [vmem:[#allocation2 + $0x38] sm:$0xf]
    %v52 = vld [vmem:[#allocation2 + $0x3c] sm:$0xf]
    %v53 = vld [vmem:[%s2] sm:$0x1]
    %v55 = vlaneseq
    %v56 = vshrl.u32 %v55, 7
    %v57 = vsub.s32 0, %v56
    %v58 = vrot.slane %v53, %v57
    %v76 = vunpack.c.l.b16 %v37
    %v77 = vunpack.c.l.b16 %v38
    %v78 = vunpack.c.l.b16 %v39
    %v79 = vunpack.c.l.b16 %v40
    %v80 = vunpack.c.l.b16 %v41
    %v81 = vunpack.c.l.b16 %v42
    %v82 = vunpack.c.l.b16 %v43
    %v83 = vunpack.c.l.b16 %v44
    %v84 = vunpack.c.l.b16 %v45
    %v85 = vunpack.c.l.b16 %v46
    %v86 = vunpack.c.l.b16 %v47
    %v87 = vunpack.c.l.b16 %v48
    %v88 = vunpack.c.l.b16 %v49
    %v89 = vunpack.c.l.b16 %v50
    %v90 = vunpack.c.l.b16 %v51
    %v91 = vunpack.c.l.b16 %v52
    %v92 = vpack.c.b16 %v77, %v76
    %v93 = vpack.c.b16 %v79, %v78
    %v94 = vpack.c.b16 %v81, %v80
    %v95 = vpack.c.b16 %v83, %v82
    %v96 = vpack.c.b16 %v85, %v84
    %v97 = vpack.c.b16 %v87, %v86
    %v98 = vpack.c.b16 %v89, %v88
    %v99 = vpack.c.b16 %v91, %v90
    %108 = vmatprep.subr.bf16.mxu0 0
    %109 = vmatpush1.bf16.msra.mxu0 %v99
    %110 = vmatprep.subr.bf16.mxu0 0
    %111 = vmatpush1.bf16.msra.mxu0 %v98
    %112 = vmatprep.subr.bf16.mxu0 0
    %113 = vmatpush1.bf16.msra.mxu0 %v97
    %114 = vmatprep.subr.bf16.mxu0 0
    %115 = vmatpush1.bf16.msra.mxu0 %v96
    %116 = vmatprep.subr.bf16.mxu0 0
    %117 = vmatpush1.bf16.msra.mxu0 %v95
    %118 = vmatprep.subr.bf16.mxu0 0
    %119 = vmatpush1.bf16.msra.mxu0 %v94
    %120 = vmatprep.subr.bf16.mxu0 0
    %121 = vmatpush1.bf16.msra.mxu0 %v93
    %122 = vmatprep.subr.bf16.mxu0 0
    %123 = vmatpush1.bf16.msra.mxu0 %v92
    %124 = vmatprep.subr.bf16.mxu0 0
    %125 = vmatpush2.bf16.msra.mxu0 0
    %126 = vmatprep.subr.bf16.mxu0 0
    %127 = vmatpush2.bf16.msra.mxu0 0
    %128 = vmatprep.subr.bf16.mxu0 0
    %129 = vmatpush2.bf16.msra.mxu0 0
    %130 = vmatprep.subr.bf16.mxu0 0
    %131 = vmatpush2.bf16.msra.mxu0 0
    %132 = vmatprep.subr.bf16.mxu0 0
    %133 = vmatpush2.bf16.msra.mxu0 0
    %134 = vmatprep.subr.bf16.mxu0 0
    %135 = vmatpush2.bf16.msra.mxu0 0
    %136 = vmatprep.subr.bf16.mxu0 0
    %137 = vmatpush2.bf16.msra.mxu0 0
    %138 = vmatprep.subr.bf16.mxu0 0
    %139 = vmatpush2.bf16.msra.mxu0 0
    %140 = vmatprep.mubr.bf16.mxu0 0
    %141 = vmatmul.mubr.bf16.gmra.mxu0 %v36
    %v142 = vpop.f32.mrf.mxu0
    %v143 = vadd.f32 %v58, %v142
    %v144 = vpop.f32.mrf.mxu0
    %v145 = vpop.f32.mrf.mxu0
    %v146 = vpop.f32.mrf.mxu0
    %147 = vdwg.mxu0
    %v148 = vxor.u32 %v143, 2147483648
    %v149 = vmul.f32 %v148, 1.442695
    %v150 = vpow.pop %v149
    %v151 = vadd.f32 %v150, 1.0
    %v152 = vrcp.pop %v151
    %v153 = vmul.f32 1.0, %v152
    %v154 = vtanh.pop %v143
    %156 = vrot.lane.b32.xlu0 %v154, 64
    %v157 = vpop.permute.xlu0 %156
    %v159 = vmul.f32 %v153, %v157
    %v160 = vtanh.pop %v159
    %162 = vrot.lane.b32.xlu0 %v160, 96
    %v163 = vpop.permute.xlu0 %162
    %v165 = vmul.f32 %v153, %v163
    %v166 = vpack.c.bf16 %v165, %v165
    %v167 = vld [vmem:[%s3] sm:$0xff]
    %v168 = vld [vmem:[%s3 + $0x8] sm:$0xff]
    %v169 = vld [vmem:[%s3 + $0x10] sm:$0xff]
    %v170 = vld [vmem:[%s3 + $0x18] sm:$0xff]
    %v171 = vld [vmem:[%s4] sm:$0x3]
    %v173 = vlaneseq
    %v174 = vshrl.u32 %v173, 7
    %v175 = vsub.s32 0, %v174
    %v176 = vrot.slane %v171, %v175
    %v177 = vlaneseq
    %v178 = vshrl.u32 %v177, 7
    %v179 = vsub.s32 1, %v178
    %v180 = vrot.slane %v171, %v179
    %184 = vrot.lane.b32.xlu0 %v166, 32
    %v185 = vpop.permute.xlu0 %184
    %v190 = vunpack.c.l.b16 %v167
    %v191 = vunpack.c.h.b16 %v167
    %v192 = vunpack.c.l.b16 %v168
    %v193 = vunpack.c.h.b16 %v168
    %v194 = vunpack.c.l.b16 %v169
    %v195 = vunpack.c.h.b16 %v169
    %v196 = vunpack.c.l.b16 %v170
    %v197 = vunpack.c.h.b16 %v170
    %v198 = vpack.c.b16 %v192, %v190
    %v199 = vpack.c.b16 %v193, %v191
    %v200 = vpack.c.b16 %v196, %v194
    %v201 = vpack.c.b16 %v197, %v195
    %vm206 = vcmask 261120
    %v208 = vsel %vm206, %v185, 0
    %210 = vmatprep.subr.bf16.mxu0 0
    %211 = vmatpush1.bf16.msra.mxu0 0
    %212 = vmatprep.subr.bf16.mxu0 0
    %213 = vmatpush1.bf16.msra.mxu0 0
    %214 = vmatprep.subr.bf16.mxu0 0
    %215 = vmatpush1.bf16.msra.mxu0 0
    %216 = vmatprep.subr.bf16.mxu0 0
    %217 = vmatpush1.bf16.msra.mxu0 0
    %218 = vmatprep.subr.bf16.mxu0 0
    %219 = vmatpush1.bf16.msra.mxu0 0
    %220 = vmatprep.subr.bf16.mxu0 0
    %221 = vmatpush1.bf16.msra.mxu0 0
    %222 = vmatprep.subr.bf16.mxu0 %v201
    %223 = vmatpush1.bf16.msra.mxu0 %v200
    %224 = vmatprep.subr.bf16.mxu0 %v199
    %225 = vmatpush1.bf16.msra.mxu0 %v198
    %226 = vmatprep.subr.bf16.mxu0 0
    %227 = vmatpush2.bf16.msra.mxu0 0
    %228 = vmatprep.subr.bf16.mxu0 0
    %229 = vmatpush2.bf16.msra.mxu0 0
    %230 = vmatprep.subr.bf16.mxu0 0
    %231 = vmatpush2.bf16.msra.mxu0 0
    %232 = vmatprep.subr.bf16.mxu0 0
    %233 = vmatpush2.bf16.msra.mxu0 0
    %234 = vmatprep.subr.bf16.mxu0 0
    %235 = vmatpush2.bf16.msra.mxu0 0
    %236 = vmatprep.subr.bf16.mxu0 0
    %237 = vmatpush2.bf16.msra.mxu0 0
    %238 = vmatprep.subr.bf16.mxu0 0
    %239 = vmatpush2.bf16.msra.mxu0 0
    %240 = vmatprep.subr.bf16.mxu0 0
    %241 = vmatpush2.bf16.msra.mxu0 0
    %242 = vmatprep.mubr.bf16.mxu0 0
    %243 = vmatmul.mubr.bf16.gmra.mxu0 %v208
    %v244 = vpop.f32.mrf.mxu0
    %v245 = vadd.f32 %v176, %v244
    %v246 = vpop.f32.mrf.mxu0
    %v247 = vadd.f32 %v180, %v246
    %v248 = vpop.f32.mrf.mxu0
    %v249 = vpop.f32.mrf.mxu0
    %250 = vdwg.mxu0
    %251 = vst [vmem:[#allocation5] sm:$0xff] %v245
    %252 = vst [vmem:[#allocation5 + $0x8] sm:$0xff] %v247
    // Predicated region
    $region26: #{lstm_forward.1} parent=1 // pred_check
      _
    $region27: #{lstm_forward.1} parent=1 // pred_check_branch
      %254 = sbr.rel (0) target = $region29
    $region28: #{lstm_forward.1} parent=1 // pred_region
      %s256 = ssub.s32 256, 256
      %257 = vsyncadd [#allocation4], %s256
      %s259 = sshll.u32 [#allocation5], 4
      %s260 = int_to_ptr.vmem [resolvable:$true] %s259
      %262 = dma.vmem_to_hbm [thread:$0]  %s260, 256, %s5, [#allocation4]
    $region29: #{lstm_forward.1} parent=1 // pred_fallthru
      _
    // Predicated region
    $region30: #{lstm_forward.1} parent=1 // pred_check
      _
    $region31: #{lstm_forward.1} parent=1 // pred_check_branch
      %264 = sbr.rel (0) target = $region33
    $region32: #{lstm_forward.1} parent=1 // pred_region
      %265 = dma.done [#allocation4], 256
    $region33: #{lstm_forward.1} parent=1 // pred_fallthru
      _
    %266 = vsyncpa [#allocation3], 1
    %267 = vsyncpa [#allocation4], 1

</llo_original>
